<compile_context>
chip_gen: v5e
topology: v5e:2x2
jax: 0.10.0
libtpu: 0.0.40
codegen_flags: <defaults>
</compile_context>

<pallas_src>
import functools

import jax
import jax.numpy as jnp
from jax.experimental import pallas as pl
from jax.experimental.pallas import tpu as pltpu

IN_F = 152
H1, H2, H3, H4, OUT_F = 200, 100, 64, 64, 1
# Lane-friendly padded hidden widths (zero padding -> numerically exact).
H1P, H2P, H3P, H4P = 256, 128, 64, 64


def _mlp_kernel(x_ref,
                w1_ref, b1_ref,
                w2_ref, b2_ref,
                w3_ref, b3_ref,
                w4_ref, b4_ref,
                w5_ref, b5_ref,
                o_ref, *, mm_dtype):
    """Fused 5-layer MLP on one (tm, 152) row tile.

    Layers 1-4: MXU matmuls in `mm_dtype` (bf16 by default) with f32
    accumulation; bias + ReLU in f32 on the VPU. Final 64->1 layer: XLU
    transpose + VPU broadcast-mul + sublane reduce, producing a lane-dense
    (1, tm) output row (keeps the MXU free, avoids masked narrow stores).
    """
    x = x_ref[...].astype(mm_dtype)                            # (tm, 152)

    h = jnp.dot(x, w1_ref[...],
                preferred_element_type=jnp.float32) + b1_ref[...]
    h = jnp.maximum(h, 0.0)                                    # (tm, 256) f32

    h = jnp.dot(h.astype(mm_dtype), w2_ref[...],
                preferred_element_type=jnp.float32) + b2_ref[...]
    h = jnp.maximum(h, 0.0)                                    # (tm, 128) f32

    h = jnp.dot(h.astype(mm_dtype), w3_ref[...],
                preferred_element_type=jnp.float32) + b3_ref[...]
    h = jnp.maximum(h, 0.0)                                    # (tm, 64) f32

    h = jnp.dot(h.astype(mm_dtype), w4_ref[...],
                preferred_element_type=jnp.float32) + b4_ref[...]
    h = jnp.maximum(h, 0.0)                                    # (tm, 64) f32

    # Final layer 64 -> 1, written lane-dense as (1, tm).
    h_t = h.T                                                  # (64, tm) f32
    y = jnp.sum(h_t * w5_ref[...], axis=0, keepdims=True) + b5_ref[...]
    o_ref[...] = y.astype(o_ref.dtype)                         # (1, tm)


def _pad_weight(w, rows, cols, dtype):
    out = jnp.zeros((rows, cols), dtype)
    return out.at[:w.shape[0], :w.shape[1]].set(w.astype(dtype))


def _pad_bias(b, cols):
    out = jnp.zeros((1, cols), jnp.float32)
    return out.at[:, :b.shape[1]].set(b.astype(jnp.float32))


def _round_up(v, k):
    return ((v + k - 1) // k) * k


@functools.partial(jax.jit, static_argnames=("tm", "use_bf16"))
def neural_network_forward(x, params, *, tm=1024, use_bf16=True):
    """x: (batch, rows, 152) float32 -> (batch, rows, 1) float32."""
    (w1, b1), (w2, b2), (w3, b3), (w4, b4), (w5, b5) = params
    mm_dtype = jnp.bfloat16 if use_bf16 else jnp.float32

    batch, rows, feat = x.shape
    assert feat == IN_F
    m = batch * rows
    x2d = x.reshape(m, feat)          # free row-major reshape; NO jnp.pad copy

    # Zero-pad hidden dims to lane-friendly widths; cast matmul weights.
    w1p = _pad_weight(w1, IN_F, H1P, mm_dtype)
    b1p = _pad_bias(b1, H1P)
    w2p = _pad_weight(w2, H1P, H2P, mm_dtype)
    b2p = _pad_bias(b2, H2P)
    w3p = _pad_weight(w3, H2P, H3P, mm_dtype)
    b3p = _pad_bias(b3, H3P)
    w4p = _pad_weight(w4, H3P, H4P, mm_dtype)
    b4p = _pad_bias(b4, H4P)
    w5c = w5.astype(jnp.float32).reshape(H4P, 1)   # (64, 1) column, f32
    b5p = b5.astype(jnp.float32).reshape(1, 1)     # scalar bias

    # M tile: big enough to amortize per-step pipeline overhead and fill the
    # MXU; clamped (multiple of 8) for small inputs so the ragged tail is tiny.
    tm_eff = min(_round_up(tm, 8), _round_up(m, 8))
    num_tiles = -(-m // tm_eff)
    out_w = num_tiles * tm_eff

    def resident(shape):
        # Full-array block, constant index -> fetched once, stays in VMEM.
        return pl.BlockSpec(shape, lambda i: (0, 0))

    in_specs = [
        pl.BlockSpec((tm_eff, IN_F), lambda i: (i, 0)),   # streamed x row tile
        resident(w1p.shape), resident(b1p.shape),
        resident(w2p.shape), resident(b2p.shape),
        resident(w3p.shape), resident(b3p.shape),
        resident(w4p.shape), resident(b4p.shape),
        resident(w5c.shape), resident(b5p.shape),
    ]
    # Lane-dense output: tile i writes columns [i*tm, (i+1)*tm) of a (1, out_w) row.
    out_specs = pl.BlockSpec((1, tm_eff), lambda i: (0, i))

    flops = 2 * m * (IN_F * H1P + H1P * H2P + H2P * H3P + H3P * H4P + H4P * OUT_F)
    w_bytes = (2 if use_bf16 else 4) * (IN_F * H1P + H1P * H2P + H2P * H3P + H3P * H4P)
    bytes_accessed = m * IN_F * 4 + out_w * 4 + w_bytes + 4 * (H1P + H2P + 2 * H3P + H4P + 1)

    kernel = functools.partial(_mlp_kernel, mm_dtype=mm_dtype)

    out = pl.pallas_call(
        kernel,
        out_shape=jax.ShapeDtypeStruct((1, out_w), jnp.float32),
        grid_spec=pltpu.PrefetchScalarGridSpec(
            num_scalar_prefetch=0,
            grid=(num_tiles,),
            in_specs=in_specs,
            out_specs=out_specs,
        ),
        compiler_params=pltpu.CompilerParams(
            dimension_semantics=("parallel",),
            vmem_limit_bytes=32 * 1024 * 1024,
        ),
        cost_estimate=pl.CostEstimate(
            flops=flops, transcendentals=0, bytes_accessed=bytes_accessed),
    )(x2d, w1p, b1p, w2p, b2p, w3p, b3p, w4p, b4p, w5c, b5p)

    return out[0, :m].reshape(batch, rows, OUT_F)


def init_params(key):
    """torch.nn.Linear-style init: U(-1/sqrt(fan_in), +1/sqrt(fan_in)).

    Weights stored as (in_features, out_features) so the kernel computes
    x @ W + b; biases stored as (1, out_features).
    """
    dims = [(IN_F, H1), (H1, H2), (H2, H3), (H3, H4), (H4, OUT_F)]
    params = []
    for fan_in, fan_out in dims:
        key, kw, kb = jax.random.split(key, 3)
        bound = 1.0 / (fan_in ** 0.5)
        w = jax.random.uniform(kw, (fan_in, fan_out), jnp.float32, -bound, bound)
        b = jax.random.uniform(kb, (1, fan_out), jnp.float32, -bound, bound)
        params.append((w, b))
    return params


def _reference_forward(x, params):
    h = x
    for i, (w, b) in enumerate(params):
        h = h @ w + b
        if i < len(params) - 1:
            h = jnp.maximum(h, 0.0)
    return h


if __name__ == "__main__":
    key = jax.random.PRNGKey(0)
    kx, kx2, kp = jax.random.split(key, 3)
    params = init_params(kp)

    # Small shapes consistent with the module's (batch, rows, 152) input.
    batch, rows = 2, 8
    x = jax.random.normal(kx, (batch, rows, IN_F), jnp.float32)
    y = jax.block_until_ready(neural_network_forward(x, params))
    assert y.shape == (batch, rows, 1), y.shape
    y_ref = _reference_forward(x, params)
    err = float(jnp.max(jnp.abs(y - y_ref)))
    assert jnp.allclose(y, y_ref, atol=3e-2, rtol=3e-2), err  # bf16 matmul tolerance

    # Second check: multi-tile + ragged M path (M = 2100 with tm=1024).
    b2_, r2_ = 3, 700
    x2 = jax.random.normal(kx2, (b2_, r2_, IN_F), jnp.float32)
    y2 = jax.block_until_ready(neural_network_forward(x2, params))
    y2_ref = _reference_forward(x2, params)
    err2 = float(jnp.max(jnp.abs(y2 - y2_ref)))
    assert y2.shape == (b2_, r2_, 1), y2.shape
    assert jnp.allclose(y2, y2_ref, atol=3e-2, rtol=3e-2), err2

    print("KERNEL_OK")
</pallas_src>

<mosaic_0001>
module attributes {stable_mosaic.version = 11 : i64} {
  func.func @_mlp_kernel(%arg0: i32, %arg1: memref<16x152xf32, #tpu.memory_space<vmem>>, %arg2: memref<152x256xbf16, #tpu.memory_space<vmem>>, %arg3: memref<1x256xf32, #tpu.memory_space<vmem>>, %arg4: memref<256x128xbf16, #tpu.memory_space<vmem>>, %arg5: memref<1x128xf32, #tpu.memory_space<vmem>>, %arg6: memref<128x64xbf16, #tpu.memory_space<vmem>>, %arg7: memref<1x64xf32, #tpu.memory_space<vmem>>, %arg8: memref<64x64xbf16, #tpu.memory_space<vmem>>, %arg9: memref<1x64xf32, #tpu.memory_space<vmem>>, %arg10: memref<64x1xf32, #tpu.memory_space<vmem>>, %arg11: memref<1x1xf32, #tpu.memory_space<vmem>>, %arg12: memref<1x16xf32, #tpu.memory_space<vmem>>) attributes {dimension_semantics = [#tpu.dimension_semantics<parallel>], iteration_bounds = array<i64: 1>, scalar_prefetch = 0 : i64, scratch_operands = 0 : i64, tpu.core_type = #tpu.core_type<tc>, window_params = [{transform_indices = @transform_0, window_bounds = array<i64: 16, 152>}, {pipeline_mode = #tpu.pipeline_mode<synchronous>, transform_indices = @transform_1, window_bounds = array<i64: 152, 256>}, {pipeline_mode = #tpu.pipeline_mode<synchronous>, transform_indices = @transform_2, window_bounds = array<i64: 1, 256>}, {pipeline_mode = #tpu.pipeline_mode<synchronous>, transform_indices = @transform_3, window_bounds = array<i64: 256, 128>}, {pipeline_mode = #tpu.pipeline_mode<synchronous>, transform_indices = @transform_4, window_bounds = array<i64: 1, 128>}, {pipeline_mode = #tpu.pipeline_mode<synchronous>, transform_indices = @transform_5, window_bounds = array<i64: 128, 64>}, {pipeline_mode = #tpu.pipeline_mode<synchronous>, transform_indices = @transform_6, window_bounds = array<i64: 1, 64>}, {pipeline_mode = #tpu.pipeline_mode<synchronous>, transform_indices = @transform_7, window_bounds = array<i64: 64, 64>}, {pipeline_mode = #tpu.pipeline_mode<synchronous>, transform_indices = @transform_8, window_bounds = array<i64: 1, 64>}, {pipeline_mode = #tpu.pipeline_mode<synchronous>, transform_indices = @transform_9, window_bounds = array<i64: 64, 1>}, {pipeline_mode = #tpu.pipeline_mode<synchronous>, transform_indices = @transform_10, window_bounds = array<i64: 1, 1>}, {transform_indices = @transform_11, window_bounds = array<i64: 1, 16>}]} {
    %c0 = arith.constant 0 : index
    %c0_0 = arith.constant 0 : index
    %0 = vector.load %arg1[%c0, %c0_0] : memref<16x152xf32, #tpu.memory_space<vmem>>, vector<16x152xf32>
    %1 = arith.truncf %0 : vector<16x152xf32> to vector<16x152xbf16>
    %c0_1 = arith.constant 0 : index
    %c0_2 = arith.constant 0 : index
    %2 = vector.load %arg2[%c0_1, %c0_2] : memref<152x256xbf16, #tpu.memory_space<vmem>>, vector<152x256xbf16>
    %cst = arith.constant dense<0.000000e+00> : vector<16x256xf32>
    %3 = tpu.matmul %1, %2, %cst {dimension_numbers = #tpu.dot_dimension_numbers<[1], [0], [0], [1], [0, 0, 1, 1], [], []>} : vector<16x152xbf16>, vector<152x256xbf16>, vector<16x256xf32> -> vector<16x256xf32>
    %c0_3 = arith.constant 0 : index
    %c0_4 = arith.constant 0 : index
    %4 = vector.load %arg3[%c0_3, %c0_4] : memref<1x256xf32, #tpu.memory_space<vmem>>, vector<1x256xf32>
    %5 = vector.broadcast %4 : vector<1x256xf32> to vector<16x256xf32>
    %6 = arith.addf %3, %5 : vector<16x256xf32>
    %cst_5 = arith.constant 0.000000e+00 : f32
    %7 = vector.broadcast %cst_5 : f32 to vector<16x256xf32>
    %8 = arith.maximumf %6, %7 : vector<16x256xf32>
    %9 = arith.truncf %8 : vector<16x256xf32> to vector<16x256xbf16>
    %c0_6 = arith.constant 0 : index
    %c0_7 = arith.constant 0 : index
    %10 = vector.load %arg4[%c0_6, %c0_7] : memref<256x128xbf16, #tpu.memory_space<vmem>>, vector<256x128xbf16>
    %cst_8 = arith.constant dense<0.000000e+00> : vector<16x128xf32>
    %11 = tpu.matmul %9, %10, %cst_8 {dimension_numbers = #tpu.dot_dimension_numbers<[1], [0], [0], [1], [0, 0, 1, 1], [], []>} : vector<16x256xbf16>, vector<256x128xbf16>, vector<16x128xf32> -> vector<16x128xf32>
    %c0_9 = arith.constant 0 : index
    %c0_10 = arith.constant 0 : index
    %12 = vector.load %arg5[%c0_9, %c0_10] : memref<1x128xf32, #tpu.memory_space<vmem>>, vector<1x128xf32>
    %13 = vector.broadcast %12 : vector<1x128xf32> to vector<16x128xf32>
    %14 = arith.addf %11, %13 : vector<16x128xf32>
    %cst_11 = arith.constant 0.000000e+00 : f32
    %15 = vector.broadcast %cst_11 : f32 to vector<16x128xf32>
    %16 = arith.maximumf %14, %15 : vector<16x128xf32>
    %17 = arith.truncf %16 : vector<16x128xf32> to vector<16x128xbf16>
    %c0_12 = arith.constant 0 : index
    %c0_13 = arith.constant 0 : index
    %18 = vector.load %arg6[%c0_12, %c0_13] : memref<128x64xbf16, #tpu.memory_space<vmem>>, vector<128x64xbf16>
    %cst_14 = arith.constant dense<0.000000e+00> : vector<16x64xf32>
    %19 = tpu.matmul %17, %18, %cst_14 {dimension_numbers = #tpu.dot_dimension_numbers<[1], [0], [0], [1], [0, 0, 1, 1], [], []>} : vector<16x128xbf16>, vector<128x64xbf16>, vector<16x64xf32> -> vector<16x64xf32>
    %c0_15 = arith.constant 0 : index
    %c0_16 = arith.constant 0 : index
    %20 = vector.load %arg7[%c0_15, %c0_16] : memref<1x64xf32, #tpu.memory_space<vmem>>, vector<1x64xf32>
    %21 = vector.broadcast %20 : vector<1x64xf32> to vector<16x64xf32>
    %22 = arith.addf %19, %21 : vector<16x64xf32>
    %cst_17 = arith.constant 0.000000e+00 : f32
    %23 = vector.broadcast %cst_17 : f32 to vector<16x64xf32>
    %24 = arith.maximumf %22, %23 : vector<16x64xf32>
    %25 = arith.truncf %24 : vector<16x64xf32> to vector<16x64xbf16>
    %c0_18 = arith.constant 0 : index
    %c0_19 = arith.constant 0 : index
    %26 = vector.load %arg8[%c0_18, %c0_19] : memref<64x64xbf16, #tpu.memory_space<vmem>>, vector<64x64xbf16>
    %cst_20 = arith.constant dense<0.000000e+00> : vector<16x64xf32>
    %27 = tpu.matmul %25, %26, %cst_20 {dimension_numbers = #tpu.dot_dimension_numbers<[1], [0], [0], [1], [0, 0, 1, 1], [], []>} : vector<16x64xbf16>, vector<64x64xbf16>, vector<16x64xf32> -> vector<16x64xf32>
    %c0_21 = arith.constant 0 : index
    %c0_22 = arith.constant 0 : index
    %28 = vector.load %arg9[%c0_21, %c0_22] : memref<1x64xf32, #tpu.memory_space<vmem>>, vector<1x64xf32>
    %29 = vector.broadcast %28 : vector<1x64xf32> to vector<16x64xf32>
    %30 = arith.addf %27, %29 : vector<16x64xf32>
    %cst_23 = arith.constant 0.000000e+00 : f32
    %31 = vector.broadcast %cst_23 : f32 to vector<16x64xf32>
    %32 = arith.maximumf %30, %31 : vector<16x64xf32>
    %33 = tpu.transpose %32, [1, 0] : vector<16x64xf32> -> vector<64x16xf32>
    %c0_24 = arith.constant 0 : index
    %c0_25 = arith.constant 0 : index
    %34 = vector.load %arg10[%c0_24, %c0_25] : memref<64x1xf32, #tpu.memory_space<vmem>>, vector<64x1xf32>
    %35 = vector.broadcast %34 : vector<64x1xf32> to vector<64x16xf32>
    %36 = arith.mulf %33, %35 : vector<64x16xf32>
    %cst_26 = arith.constant dense<0.000000e+00> : vector<16xf32>
    %37 = vector.multi_reduction <add>, %36, %cst_26 [0] : vector<64x16xf32> to vector<16xf32>
    %38 = vector.shape_cast %37 : vector<16xf32> to vector<1x16xf32>
    %c0_27 = arith.constant 0 : index
    %c0_28 = arith.constant 0 : index
    %39 = vector.load %arg11[%c0_27, %c0_28] : memref<1x1xf32, #tpu.memory_space<vmem>>, vector<1x1xf32>
    %40 = vector.broadcast %39 : vector<1x1xf32> to vector<1x16xf32>
    %41 = arith.addf %38, %40 : vector<1x16xf32>
    %c0_29 = arith.constant 0 : index
    %c0_30 = arith.constant 0 : index
    %42 = vector.load %arg12[%c0_29, %c0_30] : memref<1x16xf32, #tpu.memory_space<vmem>>, vector<1x16xf32>
    tpu.vector_store %arg12[%c0_29, %c0_30], %41 {strides = array<i32>} : memref<1x16xf32, #tpu.memory_space<vmem>>, vector<1x16xf32>,
    return
  }
  func.func @transform_0(%arg0: i32) -> (i32, i32) {
    %c0_i32 = arith.constant 0 : i32
    %c0_i32_0 = arith.constant 0 : i32
    return %arg0, %c0_i32 : i32, i32
  }
  func.func @transform_1(%arg0: i32) -> (i32, i32) {
    %c0_i32 = arith.constant 0 : i32
    %c0_i32_0 = arith.constant 0 : i32
    %c0_i32_1 = arith.constant 0 : i32
    return %c0_i32, %c0_i32_0 : i32, i32
  }
  func.func @transform_2(%arg0: i32) -> (i32, i32) {
    %c0_i32 = arith.constant 0 : i32
    %c0_i32_0 = arith.constant 0 : i32
    %c0_i32_1 = arith.constant 0 : i32
    return %c0_i32, %c0_i32_0 : i32, i32
  }
  func.func @transform_3(%arg0: i32) -> (i32, i32) {
    %c0_i32 = arith.constant 0 : i32
    %c0_i32_0 = arith.constant 0 : i32
    %c0_i32_1 = arith.constant 0 : i32
    return %c0_i32, %c0_i32_0 : i32, i32
  }
  func.func @transform_4(%arg0: i32) -> (i32, i32) {
    %c0_i32 = arith.constant 0 : i32
    %c0_i32_0 = arith.constant 0 : i32
    %c0_i32_1 = arith.constant 0 : i32
    return %c0_i32, %c0_i32_0 : i32, i32
  }
  func.func @transform_5(%arg0: i32) -> (i32, i32) {
    %c0_i32 = arith.constant 0 : i32
    %c0_i32_0 = arith.constant 0 : i32
    %c0_i32_1 = arith.constant 0 : i32
    return %c0_i32, %c0_i32_0 : i32, i32
  }
  func.func @transform_6(%arg0: i32) -> (i32, i32) {
    %c0_i32 = arith.constant 0 : i32
    %c0_i32_0 = arith.constant 0 : i32
    %c0_i32_1 = arith.constant 0 : i32
    return %c0_i32, %c0_i32_0 : i32, i32
  }
  func.func @transform_7(%arg0: i32) -> (i32, i32) {
    %c0_i32 = arith.constant 0 : i32
    %c0_i32_0 = arith.constant 0 : i32
    %c0_i32_1 = arith.constant 0 : i32
    return %c0_i32, %c0_i32_0 : i32, i32
  }
  func.func @transform_8(%arg0: i32) -> (i32, i32) {
    %c0_i32 = arith.constant 0 : i32
    %c0_i32_0 = arith.constant 0 : i32
    %c0_i32_1 = arith.constant 0 : i32
    return %c0_i32, %c0_i32_0 : i32, i32
  }
  func.func @transform_9(%arg0: i32) -> (i32, i32) {
    %c0_i32 = arith.constant 0 : i32
    %c0_i32_0 = arith.constant 0 : i32
    %c0_i32_1 = arith.constant 0 : i32
    return %c0_i32, %c0_i32_0 : i32, i32
  }
  func.func @transform_10(%arg0: i32) -> (i32, i32) {
    %c0_i32 = arith.constant 0 : i32
    %c0_i32_0 = arith.constant 0 : i32
    %c0_i32_1 = arith.constant 0 : i32
    return %c0_i32, %c0_i32_0 : i32, i32
  }
  func.func @transform_11(%arg0: i32) -> (i32, i32) {
    %c0_i32 = arith.constant 0 : i32
    %c0_i32_0 = arith.constant 0 : i32
    return %c0_i32, %arg0 : i32, i32
  }
}

</mosaic_0001>

<llo_original>
// kernel: squeeze.1
$region0: #{squeeze.1}
  %s0 = inlined_call_operand.vmem [shape: f32[16], index: 0, kind: input, shape index: {}]
  %s1 = inlined_call_operand.hbm [shape: f32[2,8,1], index: 1, kind: output, shape index: {}]
  $region1: #{squeeze.1} parent=0
    #allocation0 [shape = 'u8[1024]{0}', space=vmem, size = 0x400, scoped, tag = 'operand span for operand 1']
    #allocation1 [shape = 's32[1]{0}', space=sflag, size = 0x4, scoped, tag = 'scoped memory for squeeze.1']
    #allocation2 [shape = 'u8[4096]{0}', space=vmem, size = 0x1000, scoped, tag = 'scoped mem for output reshape']
    #allocation3 [shape = 'u8[4096]{0}', space=vmem, size = 0x1000, scoped, tag = 'scoped mem for input reshape']
    %2 = vsyncpa [#allocation1], 0
    %s4 = ssub.s32 2, 1
    %v5 = vld [vmem:[%s0] sm:%s4]
    %6 = vst [vmem:[#allocation3] sm:%s4] %v5
    %v7 = vld [vmem:[#allocation3] sm:$0x1]
    %vm8 = vcmask 64512
    %9 = vst.msk [vmem:[#allocation2] sm:$0x1] %vm8, %v7
    %v10 = vld [vmem:[#allocation3] sm:$0x1]
    %11 = vrot.lane.b32.xlu0 %v10, 120
    %v12 = vpop.permute.xlu0 %11
    %vm13 = vcmask 64512
    %s14 = scalar_lea.vmem [#allocation2], 1
    %15 = vst.msk [vmem:[%s14] sm:$0x1] %vm13, %v12
    %s17 = ssub.s32 4, 1
    %v18 = vld [vmem:[#allocation2] sm:%s17]
    %s20 = ssub.s32 4, 1
    %21 = vst [vmem:[#allocation0] sm:%s20] %v18
    %23 = vsyncadd [#allocation1], 0
    %s25 = sshll.u32 [#allocation0], 4
    %s26 = int_to_ptr.vmem [resolvable:$true] %s25
    %s27 = sshll.u32 %s1, 4
    %s28 = int_to_ptr.hbm [resolvable:$true] %s27
    %30 = dma.vmem_to_hbm [thread:$0]  %s26, 32, %s28, [#allocation1]
    %32 = dma.done [#allocation1], 32
    %33 = vsyncpa [#allocation1], 1

// kernel: neural_network_forward.1
$region0: #{neural_network_forward.1}
  #allocation0 [shape = 'u32[]', space=smem, size = 0x4, offset = 0x4, fixed_abs, tag = 'smem constant byte address 0x4 - core index']
  #allocation1 [shape = 'u32[72,128]{1,0:T(1,128)}', space=vmem, size = 0x9000, scoped, tag = 'internal scratch']
  #allocation2 [shape = 'f32[1,1]{1,0:T(1,128)S(1)}', space=vmem, size = 0x200, scoped, tag = 'scoped memory for neural_network_forward.1']
  %s0 = inlined_call_operand.vmem [shape: f32[16,152], index: 0, kind: input, shape index: {}]
  %s1 = inlined_call_operand.vmem [shape: bf16[152,256], index: 1, kind: input, shape index: {}]
  %s2 = inlined_call_operand.vmem [shape: f32[1,256], index: 2, kind: input, shape index: {}]
  %s3 = inlined_call_operand.vmem [shape: bf16[256,128], index: 3, kind: input, shape index: {}]
  %s4 = inlined_call_operand.vmem [shape: f32[1,128], index: 4, kind: input, shape index: {}]
  %s5 = inlined_call_operand.vmem [shape: bf16[128,64], index: 5, kind: input, shape index: {}]
  %s6 = inlined_call_operand.vmem [shape: f32[1,64], index: 6, kind: input, shape index: {}]
  %s7 = inlined_call_operand.vmem [shape: bf16[64,64], index: 7, kind: input, shape index: {}]
  %s8 = inlined_call_operand.vmem [shape: f32[1,64], index: 8, kind: input, shape index: {}]
  %s9 = inlined_call_operand.vmem [shape: f32[64,1], index: 9, kind: input, shape index: {}]
  %s10 = inlined_call_operand.<no memory space> [shape: f32[1,1], index: 10, kind: input, shape index: {}]
  %s11 = inlined_call_operand.vmem [shape: f32[1,16], index: 11, kind: output, shape index: {}]
  %s12 = sld [smem:[#allocation0]]
  $region54: #{neural_network_forward.1} parent=0
    _
  %s14 = ssub.s32 1, %s12
  %s15 = scalar_select 0, %s14, %s12
  %v16 = vstv %s10
  %17 = vst [vmem:[#allocation2] sm:$0x1] %v16
  // Predicated region
  $region2: #{neural_network_forward.1} parent=0 // pred_check
    _
  $region3: #{neural_network_forward.1} parent=0 // pred_check_branch
    %19 = sbr.rel (0) target = $region5
  $region4: #{neural_network_forward.1} parent=0 // pred_region
    _
  $region5: #{neural_network_forward.1} parent=0 // pred_fallthru
    _
  // Predicated region
  $region6: #{neural_network_forward.1} parent=0 // pred_check
    _
  $region7: #{neural_network_forward.1} parent=0 // pred_check_branch
    %21 = sbr.rel (0) target = $region9
  $region8: #{neural_network_forward.1} parent=0 // pred_region
    _
  $region9: #{neural_network_forward.1} parent=0 // pred_fallthru
    _
  // Predicated region
  $region10: #{neural_network_forward.1} parent=0 // pred_check
    _
  $region11: #{neural_network_forward.1} parent=0 // pred_check_branch
    %23 = sbr.rel (0) target = $region13
  $region12: #{neural_network_forward.1} parent=0 // pred_region
    _
  $region13: #{neural_network_forward.1} parent=0 // pred_fallthru
    _
  // Predicated region
  $region14: #{neural_network_forward.1} parent=0 // pred_check
    _
  $region15: #{neural_network_forward.1} parent=0 // pred_check_branch
    %25 = sbr.rel (0) target = $region17
  $region16: #{neural_network_forward.1} parent=0 // pred_region
    _
  $region17: #{neural_network_forward.1} parent=0 // pred_fallthru
    _
  // Predicated region
  $region18: #{neural_network_forward.1} parent=0 // pred_check
    _
  $region19: #{neural_network_forward.1} parent=0 // pred_check_branch
    %27 = sbr.rel (0) target = $region21
  $region20: #{neural_network_forward.1} parent=0 // pred_region
    _
  $region21: #{neural_network_forward.1} parent=0 // pred_fallthru
    _
  // Predicated region
  $region22: #{neural_network_forward.1} parent=0 // pred_check
    _
  $region23: #{neural_network_forward.1} parent=0 // pred_check_branch
    %29 = sbr.rel (0) target = $region25
  $region24: #{neural_network_forward.1} parent=0 // pred_region
    _
  $region25: #{neural_network_forward.1} parent=0 // pred_fallthru
    _
  // Predicated region
  $region26: #{neural_network_forward.1} parent=0 // pred_check
    _
  $region27: #{neural_network_forward.1} parent=0 // pred_check_branch
    %31 = sbr.rel (0) target = $region29
  $region28: #{neural_network_forward.1} parent=0 // pred_region
    _
  $region29: #{neural_network_forward.1} parent=0 // pred_fallthru
    _
  // Predicated region
  $region30: #{neural_network_forward.1} parent=0 // pred_check
    _
  $region31: #{neural_network_forward.1} parent=0 // pred_check_branch
    %33 = sbr.rel (0) target = $region33
  $region32: #{neural_network_forward.1} parent=0 // pred_region
    _
  $region33: #{neural_network_forward.1} parent=0 // pred_fallthru
    _
  // Predicated region
  $region34: #{neural_network_forward.1} parent=0 // pred_check
    _
  $region35: #{neural_network_forward.1} parent=0 // pred_check_branch
    %35 = sbr.rel (0) target = $region37
  $region36: #{neural_network_forward.1} parent=0 // pred_region
    _
  $region37: #{neural_network_forward.1} parent=0 // pred_fallthru
    _
  // Predicated region
  $region38: #{neural_network_forward.1} parent=0 // pred_check
    _
  $region39: #{neural_network_forward.1} parent=0 // pred_check_branch
    %37 = sbr.rel (0) target = $region41
  $region40: #{neural_network_forward.1} parent=0 // pred_region
    _
  $region41: #{neural_network_forward.1} parent=0 // pred_fallthru
    _
  // Predicated region
  $region42: #{neural_network_forward.1} parent=0 // pred_check
    _
  $region43: #{neural_network_forward.1} parent=0 // pred_check_branch
    %39 = sbr.rel (0) target = $region45
  $region44: #{neural_network_forward.1} parent=0 // pred_region
    _
  $region45: #{neural_network_forward.1} parent=0 // pred_fallthru
    _
  %v41 = vld [vmem:[%s0] sm:$0xff]
  %v42 = vld [vmem:[%s0 + $0x8] sm:$0xff]
  %v43 = vld [vmem:[%s0 + $0x10] sm:$0xff]
  %v44 = vld [vmem:[%s0 + $0x18] sm:$0xff]
  %v45 = vpack.c.bf16 %v43, %v41
  %v46 = vpack.c.bf16 %v44, %v42
  %v47 = vld [vmem:[%s1] sm:$0xff]
  %v48 = vld [vmem:[%s1 + $0x8] sm:$0xff]
  %v49 = vld [vmem:[%s1 + $0x10] sm:$0xff]
  %v50 = vld [vmem:[%s1 + $0x18] sm:$0xff]
  %v51 = vld [vmem:[%s1 + $0x20] sm:$0xff]
  %v52 = vld [vmem:[%s1 + $0x28] sm:$0xff]
  %v53 = vld [vmem:[%s1 + $0x30] sm:$0xff]
  %v54 = vld [vmem:[%s1 + $0x38] sm:$0xff]
  %v55 = vld [vmem:[%s1 + $0x40] sm:$0xff]
  %v56 = vld [vmem:[%s1 + $0x48] sm:$0xff]
  %v57 = vld [vmem:[%s1 + $0x50] sm:$0xff]
  %v58 = vld [vmem:[%s1 + $0x58] sm:$0xff]
  %v59 = vld [vmem:[%s1 + $0x60] sm:$0xff]
  %v60 = vld [vmem:[%s1 + $0x68] sm:$0xff]
  %v61 = vld [vmem:[%s1 + $0x70] sm:$0xff]
  %v62 = vld [vmem:[%s1 + $0x78] sm:$0xff]
  %v63 = vld [vmem:[%s1 + $0x80] sm:$0xff]
  %v64 = vld [vmem:[%s1 + $0x88] sm:$0xff]
  %v65 = vld [vmem:[%s1 + $0x90] sm:$0xff]
  %v66 = vld [vmem:[%s2] sm:$0x3]
  %v68 = vperm.slane %v66, 0
  %v69 = vperm.slane %v66, 1
  %v91 = vunpack.c.l.b16 %v47
  %v92 = vunpack.c.h.b16 %v47
  %v93 = vunpack.c.l.b16 %v48
  %v94 = vunpack.c.h.b16 %v48
  %v95 = vunpack.c.l.b16 %v49
  %v96 = vunpack.c.h.b16 %v49
  %v97 = vunpack.c.l.b16 %v50
  %v98 = vunpack.c.h.b16 %v50
  %v99 = vunpack.c.l.b16 %v51
  %v100 = vunpack.c.h.b16 %v51
  %v101 = vunpack.c.l.b16 %v52
  %v102 = vunpack.c.h.b16 %v52
  %v103 = vunpack.c.l.b16 %v53
  %v104 = vunpack.c.h.b16 %v53
  %v105 = vunpack.c.l.b16 %v54
  %v106 = vunpack.c.h.b16 %v54
  %v107 = vunpack.c.l.b16 %v55
  %v108 = vunpack.c.h.b16 %v55
  %v109 = vunpack.c.l.b16 %v56
  %v110 = vunpack.c.h.b16 %v56
  %v111 = vunpack.c.l.b16 %v57
  %v112 = vunpack.c.h.b16 %v57
  %v113 = vunpack.c.l.b16 %v58
  %v114 = vunpack.c.h.b16 %v58
  %v115 = vunpack.c.l.b16 %v59
  %v116 = vunpack.c.h.b16 %v59
  %v117 = vunpack.c.l.b16 %v60
  %v118 = vunpack.c.h.b16 %v60
  %v119 = vunpack.c.l.b16 %v61
  %v120 = vunpack.c.h.b16 %v61
  %v121 = vunpack.c.l.b16 %v62
  %v122 = vunpack.c.h.b16 %v62
  %v123 = vunpack.c.l.b16 %v63
  %v124 = vunpack.c.h.b16 %v63
  %v125 = vunpack.c.l.b16 %v64
  %v126 = vunpack.c.h.b16 %v64
  %v127 = vunpack.c.l.b16 %v65
  %v128 = vunpack.c.h.b16 %v65
  %v129 = vpack.c.b16 %v93, %v91
  %v130 = vpack.c.b16 %v94, %v92
  %v131 = vpack.c.b16 %v97, %v95
  %v132 = vpack.c.b16 %v98, %v96
  %v133 = vpack.c.b16 %v101, %v99
  %v134 = vpack.c.b16 %v102, %v100
  %v135 = vpack.c.b16 %v105, %v103
  %v136 = vpack.c.b16 %v106, %v104
  %v137 = vpack.c.b16 %v109, %v107
  %v138 = vpack.c.b16 %v110, %v108
  %v139 = vpack.c.b16 %v113, %v111
  %v140 = vpack.c.b16 %v114, %v112
  %v141 = vpack.c.b16 %v117, %v115
  %v142 = vpack.c.b16 %v118, %v116
  %v143 = vpack.c.b16 %v121, %v119
  %v144 = vpack.c.b16 %v122, %v120
  %v145 = vpack.c.b16 %v125, %v123
  %v146 = vpack.c.b16 %v126, %v124
  %v147 = vpack.c.b16 %v127, %v127
  %v148 = vpack.c.b16 %v128, %v128
  %vm167 = vcmask 195584
  %v169 = vsel %vm167, %v46, 0
  %vm171 = vcmask 1043456
  %v173 = vsel %vm171, %v147, 0
  %v176 = vsel %vm171, %v148, 0
  %178 = vmatpush.bf16.msra.mxu0 %v143
  %179 = vmatpush.bf16.msra.mxu0 %v141
  %180 = vmatpush.bf16.msra.mxu0 %v139
  %181 = vmatpush.bf16.msra.mxu0 %v137
  %182 = vmatpush.bf16.msra.mxu0 %v135
  %183 = vmatpush.bf16.msra.mxu0 %v133
  %184 = vmatpush.bf16.msra.mxu0 %v131
  %185 = vmatpush.bf16.msra.mxu0 %v129
  %186 = vmatmul.bf16.gmra.mxu0 %v45
  %v187 = vpop.f32.mrf.mxu0
  %v188 = vadd.f32 %v68, %v187
  %v189 = vpop.f32.mrf.mxu0
  %v190 = vadd.f32 %v68, %v189
  %191 = vdwg.mxu0
  %192 = vmatpush.bf16.msra.mxu0 0
  %193 = vmatpush.bf16.msra.mxu0 0
  %194 = vmatpush.bf16.msra.mxu0 0
  %195 = vmatpush.bf16.msra.mxu0 0
  %196 = vmatpush.bf16.msra.mxu0 0
  %197 = vmatpush.bf16.msra.mxu0 0
  %198 = vmatpush.bf16.msra.mxu0 %v173
  %199 = vmatpush.bf16.msra.mxu0 %v145
  %200 = vmatmul.bf16.gmra.mxu0 %v169
  %v201 = vpop.f32.mrf.mxu0
  %v202 = vadd.f32 %v188, %v201
  %v203 = vpop.f32.mrf.mxu0
  %v204 = vadd.f32 %v190, %v203
  %205 = vdwg.mxu0
  %206 = vmatpush.bf16.msra.mxu0 %v144
  %207 = vmatpush.bf16.msra.mxu0 %v142
  %208 = vmatpush.bf16.msra.mxu0 %v140
  %209 = vmatpush.bf16.msra.mxu0 %v138
  %210 = vmatpush.bf16.msra.mxu0 %v136
  %211 = vmatpush.bf16.msra.mxu0 %v134
  %212 = vmatpush.bf16.msra.mxu0 %v132
  %213 = vmatpush.bf16.msra.mxu0 %v130
  %214 = vmatmul.bf16.gmra.mxu0 %v45
  %v215 = vpop.f32.mrf.mxu0
  %v216 = vadd.f32 %v69, %v215
  %v217 = vpop.f32.mrf.mxu0
  %v218 = vadd.f32 %v69, %v217
  %219 = vdwg.mxu0
  %220 = vmatpush.bf16.msra.mxu0 0
  %221 = vmatpush.bf16.msra.mxu0 0
  %222 = vmatpush.bf16.msra.mxu0 0
  %223 = vmatpush.bf16.msra.mxu0 0
  %224 = vmatpush.bf16.msra.mxu0 0
  %225 = vmatpush.bf16.msra.mxu0 0
  %226 = vmatpush.bf16.msra.mxu0 %v176
  %227 = vmatpush.bf16.msra.mxu0 %v146
  %228 = vmatmul.bf16.gmra.mxu0 %v169
  %v229 = vpop.f32.mrf.mxu0
  %v230 = vadd.f32 %v216, %v229
  %v231 = vpop.f32.mrf.mxu0
  %v232 = vadd.f32 %v218, %v231
  %233 = vdwg.mxu0
  %v234 = vmax.f32 %v202, 0.0
  %v235 = vmax.f32 %v230, 0.0
  %v236 = vmax.f32 %v204, 0.0
  %v237 = vmax.f32 %v232, 0.0
  %v238 = vpack.c.bf16 %v236, %v234
  %v239 = vpack.c.bf16 %v237, %v235
  %v240 = vld [vmem:[%s3] sm:$0xf]
  %v241 = vld [vmem:[%s3 + $0x4] sm:$0xf]
  %v242 = vld [vmem:[%s3 + $0x8] sm:$0xf]
  %v243 = vld [vmem:[%s3 + $0xc] sm:$0xf]
  %v244 = vld [vmem:[%s3 + $0x10] sm:$0xf]
  %v245 = vld [vmem:[%s3 + $0x14] sm:$0xf]
  %v246 = vld [vmem:[%s3 + $0x18] sm:$0xf]
  %v247 = vld [vmem:[%s3 + $0x1c] sm:$0xf]
  %v248 = vld [vmem:[%s3 + $0x20] sm:$0xf]
  %v249 = vld [vmem:[%s3 + $0x24] sm:$0xf]
  %v250 = vld [vmem:[%s3 + $0x28] sm:$0xf]
  %v251 = vld [vmem:[%s3 + $0x2c] sm:$0xf]
  %v252 = vld [vmem:[%s3 + $0x30] sm:$0xf]
  %v253 = vld [vmem:[%s3 + $0x34] sm:$0xf]
  %v254 = vld [vmem:[%s3 + $0x38] sm:$0xf]
  %v255 = vld [vmem:[%s3 + $0x3c] sm:$0xf]
  %v256 = vld [vmem:[%s3 + $0x40] sm:$0xf]
  %v257 = vld [vmem:[%s3 + $0x44] sm:$0xf]
  %v258 = vld [vmem:[%s3 + $0x48] sm:$0xf]
  %v259 = vld [vmem:[%s3 + $0x4c] sm:$0xf]
  %v260 = vld [vmem:[%s3 + $0x50] sm:$0xf]
  %v261 = vld [vmem:[%s3 + $0x54] sm:$0xf]
  %v262 = vld [vmem:[%s3 + $0x58] sm:$0xf]
  %v263 = vld [vmem:[%s3 + $0x5c] sm:$0xf]
  %v264 = vld [vmem:[%s3 + $0x60] sm:$0xf]
  %v265 = vld [vmem:[%s3 + $0x64] sm:$0xf]
  %v266 = vld [vmem:[%s3 + $0x68] sm:$0xf]
  %v267 = vld [vmem:[%s3 + $0x6c] sm:$0xf]
  %v268 = vld [vmem:[%s3 + $0x70] sm:$0xf]
  %v269 = vld [vmem:[%s3 + $0x74] sm:$0xf]
  %v270 = vld [vmem:[%s3 + $0x78] sm:$0xf]
  %v271 = vld [vmem:[%s3 + $0x7c] sm:$0xf]
  %v272 = vld [vmem:[%s4] sm:$0x1]
  %v274 = vperm.slane %v272, 0
  %v308 = vunpack.c.l.b16 %v240
  %v309 = vunpack.c.l.b16 %v241
  %v310 = vunpack.c.l.b16 %v242
  %v311 = vunpack.c.l.b16 %v243
  %v312 = vunpack.c.l.b16 %v244
  %v313 = vunpack.c.l.b16 %v245
  %v314 = vunpack.c.l.b16 %v246
  %v315 = vunpack.c.l.b16 %v247
  %v316 = vunpack.c.l.b16 %v248
  %v317 = vunpack.c.l.b16 %v249
  %v318 = vunpack.c.l.b16 %v250
  %v319 = vunpack.c.l.b16 %v251
  %v320 = vunpack.c.l.b16 %v252
  %v321 = vunpack.c.l.b16 %v253
  %v322 = vunpack.c.l.b16 %v254
  %v323 = vunpack.c.l.b16 %v255
  %v324 = vunpack.c.l.b16 %v256
  %v325 = vunpack.c.l.b16 %v257
  %v326 = vunpack.c.l.b16 %v258
  %v327 = vunpack.c.l.b16 %v259
  %v328 = vunpack.c.l.b16 %v260
  %v329 = vunpack.c.l.b16 %v261
  %v330 = vunpack.c.l.b16 %v262
  %v331 = vunpack.c.l.b16 %v263
  %v332 = vunpack.c.l.b16 %v264
  %v333 = vunpack.c.l.b16 %v265
  %v334 = vunpack.c.l.b16 %v266
  %v335 = vunpack.c.l.b16 %v267
  %v336 = vunpack.c.l.b16 %v268
  %v337 = vunpack.c.l.b16 %v269
  %v338 = vunpack.c.l.b16 %v270
  %v339 = vunpack.c.l.b16 %v271
  %v340 = vpack.c.b16 %v309, %v308
  %v341 = vpack.c.b16 %v311, %v310
  %v342 = vpack.c.b16 %v313, %v312
  %v343 = vpack.c.b16 %v315, %v314
  %v344 = vpack.c.b16 %v317, %v316
  %v345 = vpack.c.b16 %v319, %v318
  %v346 = vpack.c.b16 %v321, %v320
  %v347 = vpack.c.b16 %v323, %v322
  %v348 = vpack.c.b16 %v325, %v324
  %v349 = vpack.c.b16 %v327, %v326
  %v350 = vpack.c.b16 %v329, %v328
  %v351 = vpack.c.b16 %v331, %v330
  %v352 = vpack.c.b16 %v333, %v332
  %v353 = vpack.c.b16 %v335, %v334
  %v354 = vpack.c.b16 %v337, %v336
  %v355 = vpack.c.b16 %v339, %v338
  %372 = vmatpush.bf16.msra.mxu0 %v347
  %373 = vmatpush.bf16.msra.mxu0 %v346
  %374 = vmatpush.bf16.msra.mxu0 %v345
  %375 = vmatpush.bf16.msra.mxu0 %v344
  %376 = vmatpush.bf16.msra.mxu0 %v343
  %377 = vmatpush.bf16.msra.mxu0 %v342
  %378 = vmatpush.bf16.msra.mxu0 %v341
  %379 = vmatpush.bf16.msra.mxu0 %v340
  %380 = vmatmul.bf16.gmra.mxu0 %v238
  %v381 = vpop.f32.mrf.mxu0
  %v382 = vadd.f32 %v274, %v381
  %v383 = vpop.f32.mrf.mxu0
  %v384 = vadd.f32 %v274, %v383
  %385 = vdwg.mxu0
  %386 = vmatpush.bf16.msra.mxu0 %v355
  %387 = vmatpush.bf16.msra.mxu0 %v354
  %388 = vmatpush.bf16.msra.mxu0 %v353
  %389 = vmatpush.bf16.msra.mxu0 %v352
  %390 = vmatpush.bf16.msra.mxu0 %v351
  %391 = vmatpush.bf16.msra.mxu0 %v350
  %392 = vmatpush.bf16.msra.mxu0 %v349
  %393 = vmatpush.bf16.msra.mxu0 %v348
  %394 = vmatmul.bf16.gmra.mxu0 %v239
  %v395 = vpop.f32.mrf.mxu0
  %v396 = vadd.f32 %v382, %v395
  %v397 = vpop.f32.mrf.mxu0
  %v398 = vadd.f32 %v384, %v397
  %399 = vdwg.mxu0
  %v400 = vmax.f32 %v396, 0.0
  %v401 = vmax.f32 %v398, 0.0
  %v402 = vpack.c.bf16 %v401, %v400
  %v403 = vld [vmem:[%s5] sm:$0xf]
  %v404 = vld [vmem:[%s5 + $0x4] sm:$0xf]
  %v405 = vld [vmem:[%s5 + $0x8] sm:$0xf]
  %v406 = vld [vmem:[%s5 + $0xc] sm:$0xf]
  %v407 = vld [vmem:[%s5 + $0x10] sm:$0xf]
  %v408 = vld [vmem:[%s5 + $0x14] sm:$0xf]
  %v409 = vld [vmem:[%s5 + $0x18] sm:$0xf]
  %v410 = vld [vmem:[%s5 + $0x1c] sm:$0xf]
  %v411 = vld [vmem:[%s5 + $0x20] sm:$0xf]
  %v412 = vld [vmem:[%s5 + $0x24] sm:$0xf]
  %v413 = vld [vmem:[%s5 + $0x28] sm:$0xf]
  %v414 = vld [vmem:[%s5 + $0x2c] sm:$0xf]
  %v415 = vld [vmem:[%s5 + $0x30] sm:$0xf]
  %v416 = vld [vmem:[%s5 + $0x34] sm:$0xf]
  %v417 = vld [vmem:[%s5 + $0x38] sm:$0xf]
  %v418 = vld [vmem:[%s5 + $0x3c] sm:$0xf]
  %v419 = vld [vmem:[%s6] sm:$0x1]
  %v421 = vperm.slane %v419, 0
  %v439 = vunpack.c.l.b16 %v403
  %v440 = vunpack.c.l.b16 %v404
  %v441 = vunpack.c.l.b16 %v405
  %v442 = vunpack.c.l.b16 %v406
  %v443 = vunpack.c.l.b16 %v407
  %v444 = vunpack.c.l.b16 %v408
  %v445 = vunpack.c.l.b16 %v409
  %v446 = vunpack.c.l.b16 %v410
  %v447 = vunpack.c.l.b16 %v411
  %v448 = vunpack.c.l.b16 %v412
  %v449 = vunpack.c.l.b16 %v413
  %v450 = vunpack.c.l.b16 %v414
  %v451 = vunpack.c.l.b16 %v415
  %v452 = vunpack.c.l.b16 %v416
  %v453 = vunpack.c.l.b16 %v417
  %v454 = vunpack.c.l.b16 %v418
  %v455 = vpack.c.b16 %v440, %v439
  %v456 = vpack.c.b16 %v442, %v441
  %v457 = vpack.c.b16 %v444, %v443
  %v458 = vpack.c.b16 %v446, %v445
  %v459 = vpack.c.b16 %v448, %v447
  %v460 = vpack.c.b16 %v450, %v449
  %v461 = vpack.c.b16 %v452, %v451
  %v462 = vpack.c.b16 %v454, %v453
  %471 = vmatpush.bf16.msra.mxu0 %v462
  %472 = vmatpush.bf16.msra.mxu0 %v461
  %473 = vmatpush.bf16.msra.mxu0 %v460
  %474 = vmatpush.bf16.msra.mxu0 %v459
  %475 = vmatpush.bf16.msra.mxu0 %v458
  %476 = vmatpush.bf16.msra.mxu0 %v457
  %477 = vmatpush.bf16.msra.mxu0 %v456
  %478 = vmatpush.bf16.msra.mxu0 %v455
  %479 = vmatmul.bf16.gmra.mxu0 %v402
  %v480 = vpop.f32.mrf.mxu0
  %v481 = vadd.f32 %v421, %v480
  %v482 = vpop.f32.mrf.mxu0
  %v483 = vadd.f32 %v421, %v482
  %484 = vdwg.mxu0
  %v485 = vmax.f32 %v481, 0.0
  %v486 = vmax.f32 %v483, 0.0
  %v487 = vpack.c.bf16 %v486, %v485
  %v488 = vld [vmem:[%s7] sm:$0xf]
  %v489 = vld [vmem:[%s7 + $0x4] sm:$0xf]
  %v490 = vld [vmem:[%s7 + $0x8] sm:$0xf]
  %v491 = vld [vmem:[%s7 + $0xc] sm:$0xf]
  %v492 = vld [vmem:[%s7 + $0x10] sm:$0xf]
  %v493 = vld [vmem:[%s7 + $0x14] sm:$0xf]
  %v494 = vld [vmem:[%s7 + $0x18] sm:$0xf]
  %v495 = vld [vmem:[%s7 + $0x1c] sm:$0xf]
  %v496 = vld [vmem:[%s8] sm:$0x1]
  %v498 = vperm.slane %v496, 0
  %v508 = vunpack.c.l.b16 %v488
  %v509 = vunpack.c.l.b16 %v489
  %v510 = vunpack.c.l.b16 %v490
  %v511 = vunpack.c.l.b16 %v491
  %v512 = vunpack.c.l.b16 %v492
  %v513 = vunpack.c.l.b16 %v493
  %v514 = vunpack.c.l.b16 %v494
  %v515 = vunpack.c.l.b16 %v495
  %v516 = vpack.c.b16 %v509, %v508
  %v517 = vpack.c.b16 %v511, %v510
  %v518 = vpack.c.b16 %v513, %v512
  %v519 = vpack.c.b16 %v515, %v514
  %vm524 = vcmask 523264
  %v526 = vsel %vm524, %v487, 0
  %528 = vmatpush.bf16.msra.mxu0 0
  %529 = vmatpush.bf16.msra.mxu0 0
  %530 = vmatpush.bf16.msra.mxu0 0
  %531 = vmatpush.bf16.msra.mxu0 0
  %532 = vmatpush.bf16.msra.mxu0 %v519
  %533 = vmatpush.bf16.msra.mxu0 %v518
  %534 = vmatpush.bf16.msra.mxu0 %v517
  %535 = vmatpush.bf16.msra.mxu0 %v516
  %536 = vmatmul.bf16.gmra.mxu0 %v526
  %v537 = vpop.f32.mrf.mxu0
  %v538 = vadd.f32 %v498, %v537
  %v539 = vpop.f32.mrf.mxu0
  %v540 = vadd.f32 %v498, %v539
  %541 = vdwg.mxu0
  %v542 = vmax.f32 %v538, 0.0
  %v543 = vmax.f32 %v540, 0.0
  %544 = vxpose.xlu0.b32.start [1/16] %v542, 128
  %545 = vxpose.xlu0.b32.cont [2/16] %v543, 128
  %546 = vxpose.xlu0.b32.cont [3/16] 0.0, 128
  %547 = vxpose.xlu0.b32.cont [4/16] 0.0, 128
  %548 = vxpose.xlu0.b32.cont [5/16] 0.0, 128
  %549 = vxpose.xlu0.b32.cont [6/16] 0.0, 128
  %550 = vxpose.xlu0.b32.cont [7/16] 0.0, 128
  %551 = vxpose.xlu0.b32.cont [8/16] 0.0, 128
  %552 = vxpose.xlu0.b32.cont [9/16] 0.0, 128
  %553 = vxpose.xlu0.b32.cont [10/16] 0.0, 128
  %554 = vxpose.xlu0.b32.cont [11/16] 0.0, 128
  %555 = vxpose.xlu0.b32.cont [12/16] 0.0, 128
  %556 = vxpose.xlu0.b32.cont [13/16] 0.0, 128
  %557 = vxpose.xlu0.b32.cont [14/16] 0.0, 128
  %558 = vxpose.xlu0.b32.cont [15/16] 0.0, 128
  %559 = vxpose.xlu0.b32.end [16/16] 0.0, 128
  %v560 = vpop.trf.xlu0
  %v561 = vpop.trf.xlu0
  %v562 = vpop.trf.xlu0
  %v563 = vpop.trf.xlu0
  %v564 = vpop.trf.xlu0
  %v565 = vpop.trf.xlu0
  %v566 = vpop.trf.xlu0
  %v567 = vpop.trf.xlu0
  %v568 = vpop.trf.xlu0
  %v569 = vpop.trf.xlu0
  %v570 = vpop.trf.xlu0
  %v571 = vpop.trf.xlu0
  %v572 = vpop.trf.xlu0
  %v573 = vpop.trf.xlu0
  %v574 = vpop.trf.xlu0
  %v575 = vpop.trf.xlu0
  %v576 = vld [vmem:[%s9] sm:$0xff]
  %v577 = vld [vmem:[%s9 + $0x8] sm:$0xff]
  %v578 = vld [vmem:[%s9 + $0x10] sm:$0xff]
  %v579 = vld [vmem:[%s9 + $0x18] sm:$0xff]
  %v580 = vld [vmem:[%s9 + $0x20] sm:$0xff]
  %v581 = vld [vmem:[%s9 + $0x28] sm:$0xff]
  %v582 = vld [vmem:[%s9 + $0x30] sm:$0xff]
  %v583 = vld [vmem:[%s9 + $0x38] sm:$0xff]
  %585 = vset.pattern.permute.xlu0 0
  %586 = vperm.xlu0 %585, %v576
  %v587 = vpop.permute.xlu0 %586
  %590 = vset.pattern.permute.xlu0 0
  %591 = vperm.xlu0 %590, %v577
  %v592 = vpop.permute.xlu0 %591
  %595 = vset.pattern.permute.xlu0 0
  %596 = vperm.xlu0 %595, %v578
  %v597 = vpop.permute.xlu0 %596
  %600 = vset.pattern.permute.xlu0 0
  %601 = vperm.xlu0 %600, %v579
  %v602 = vpop.permute.xlu0 %601
  %605 = vset.pattern.permute.xlu0 0
  %606 = vperm.xlu0 %605, %v580
  %v607 = vpop.permute.xlu0 %606
  %610 = vset.pattern.permute.xlu0 0
  %611 = vperm.xlu0 %610, %v581
  %v612 = vpop.permute.xlu0 %611
  %615 = vset.pattern.permute.xlu0 0
  %616 = vperm.xlu0 %615, %v582
  %v617 = vpop.permute.xlu0 %616
  %620 = vset.pattern.permute.xlu0 0
  %621 = vperm.xlu0 %620, %v583
  %v622 = vpop.permute.xlu0 %621
  %v624 = vmul.f32 %v560, %v587
  %v625 = vmul.f32 %v561, %v592
  %v626 = vmul.f32 %v562, %v597
  %v627 = vmul.f32 %v563, %v602
  %v628 = vmul.f32 %v564, %v607
  %v629 = vmul.f32 %v565, %v612
  %v630 = vmul.f32 %v566, %v617
  %v631 = vmul.f32 %v567, %v622
  %vm632 = vcmask 130048
  %v633 = vsel %vm632, %v624, 0.0
  %v634 = vsel %vm632, %v625, 0.0
  %v635 = vadd.f32 %v633, %v634
  %v636 = vsel %vm632, %v626, 0.0
  %v637 = vadd.f32 %v635, %v636
  %v638 = vsel %vm632, %v627, 0.0
  %v639 = vadd.f32 %v637, %v638
  %v640 = vsel %vm632, %v628, 0.0
  %v641 = vadd.f32 %v639, %v640
  %v642 = vsel %vm632, %v629, 0.0
  %v643 = vadd.f32 %v641, %v642
  %v644 = vsel %vm632, %v630, 0.0
  %v645 = vadd.f32 %v643, %v644
  %v646 = vsel %vm632, %v631, 0.0
  %v647 = vadd.f32 %v645, %v646
  %v648 = vrot.slane %v647, 4
  %v649 = vadd.f32 %v647, %v648
  %v650 = vrot.slane %v649, 2
  %v651 = vadd.f32 %v649, %v650
  %v652 = vrot.slane %v651, 1
  %v653 = vadd.f32 %v651, %v652
  %v654 = vld [vmem:[#allocation2] sm:$0x1]
  %656 = vset.pattern.permute.xlu0 0
  %657 = vperm.xlu0 %656, %v654
  %v658 = vpop.permute.xlu0 %657
  %v660 = vperm.slane %v658, 0
  %v661 = vadd.f32 %v653, %v660
  %vm662 = vcmask 122880
  %663 = vst.msk [vmem:[%s11] sm:$0x1] %vm662, %v661
  // Predicated region
  $region46: #{neural_network_forward.1} parent=0 // pred_check
    _
  $region47: #{neural_network_forward.1} parent=0 // pred_check_branch
    %665 = sbr.rel (0) target = $region49
  $region48: #{neural_network_forward.1} parent=0 // pred_region
    _
  $region49: #{neural_network_forward.1} parent=0 // pred_fallthru
    _
  // Predicated region
  $region50: #{neural_network_forward.1} parent=0 // pred_check
    _
  $region51: #{neural_network_forward.1} parent=0 // pred_check_branch
    %667 = sbr.rel (0) target = $region53
  $region52: #{neural_network_forward.1} parent=0 // pred_region
    _
  $region53: #{neural_network_forward.1} parent=0 // pred_fallthru
    _

</llo_original>
